<compile_context>
chip_gen: v5e
topology: v5e:2x2
jax: 0.10.0
libtpu: 0.0.40
codegen_flags: <defaults>
</compile_context>

<pallas_src>
import math

import jax
import jax.numpy as jnp
from jax import lax
from jax.experimental import pallas as pl
from jax.experimental.pallas import tpu as pltpu


# ---------------------------------------------------------------------------
# step planning (static, host side)
# ---------------------------------------------------------------------------
def _segment_plan(t, step_size):
    """For every consecutive (t0, t1) pair in t return (n_full_steps, h, h_rem).

    Matches torchdiffeq fixed-grid euler: n_full steps of size h, plus one final
    fractional step of size h_rem so the segment ends exactly at t1.
    NOTE: t is concretized on the host (static step counts are required to
    build the kernel); do not pass a traced t.
    """
    ts = [float(v) for v in t]
    segs = []
    for t0, t1 in zip(ts[:-1], ts[1:]):
        span = t1 - t0
        n = int(math.floor(span / step_size + 1e-9))
        h_rem = span - n * step_size
        if h_rem <= 1e-6 * step_size:
            h_rem = 0.0
        segs.append((n, float(step_size), h_rem))
    return tuple(segs)


# ---------------------------------------------------------------------------
# kernel
# ---------------------------------------------------------------------------
def _make_neural_ode_kernel(segments, num_states, num_signals, hidden):
    """Euler integration of dx = W2 @ tanh(W1x x + W1u u + b1) + b2, du = 0."""

    ns, nu = num_states, num_signals

    def kernel(x_ref, u_ref, w1_ref, w2_ref, traj_ref):
        x0 = x_ref[...].astype(jnp.float32)
        u = u_ref[...].astype(jnp.float32)

        # unpack the two packed parameter slabs (static slices, outside loop)
        w1p = w1_ref[...]
        w2p = w2_ref[...]
        w1x = w1p[:ns, :]
        w1u = w1p[ns:ns + nu, :]
        b1 = w1p[ns + nu:ns + nu + 1, :]
        w2 = w2p[:hidden, :]
        b2 = w2p[hidden:hidden + 1, :]

        # du/dt == 0  ->  the signal (and first-layer bias) contribution to the
        # hidden pre-activation is constant across all euler steps; hoist it.
        c = jnp.dot(u, w1u, preferred_element_type=jnp.float32) + b1

        # trajectory point at t[0] is the initial condition
        traj_ref[0] = x0.astype(traj_ref.dtype)

        x = x0
        for seg_idx, (n_steps, h, h_rem) in enumerate(segments):
            # pre-scale the output layer by the step size once, before the loop
            # (removes a per-step vmul + broadcast from the serial dep-chain)
            w2h = jnp.float32(h) * w2
            b2h = jnp.float32(h) * b2

            def euler_step(_, xc, w2h=w2h, b2h=b2h):
                hid = jnp.tanh(
                    jnp.dot(xc, w1x, preferred_element_type=jnp.float32) + c
                )
                return (
                    xc
                    + jnp.dot(hid, w2h, preferred_element_type=jnp.float32)
                    + b2h
                )

            if n_steps > 0:
                # bounded unroll: keeps LLO scheduler visibility without the
                # code-size / compile-time cliff of full unroll at large n_steps
                unroll = min(n_steps, 8)
                x = lax.fori_loop(0, n_steps, euler_step, x, unroll=unroll)

            if h_rem > 0.0:
                # final fractional step so we land exactly on the segment end
                hid = jnp.tanh(
                    jnp.dot(x, w1x, preferred_element_type=jnp.float32) + c
                )
                dx = jnp.dot(hid, w2, preferred_element_type=jnp.float32) + b2
                x = x + jnp.float32(h_rem) * dx

            traj_ref[seg_idx + 1] = x.astype(traj_ref.dtype)

    return kernel


# ---------------------------------------------------------------------------
# wrapper
# ---------------------------------------------------------------------------
def neural_ode_forward(t, x, u, params, step_size=0.01, batch_tile=None):
    """Pallas equivalent of NeuralODE.forward(t, x, u), solver='euler'."""
    w1x, w1u, b1, w2, b2 = params
    num_states, hidden = w1x.shape
    num_signals = w1u.shape[0]

    if u is None:
        # module semantics: zero signal input (its contribution to dx is zero)
        u = jnp.zeros((x.shape[0], num_signals), x.dtype)

    batch = x.shape[0]
    segments = _segment_plan(t, step_size)
    T = len(segments) + 1

    # Pack the 5 small parameter arrays into 2 DMAs:
    #   W1p = [w1x; w1u; b1]  (ns+nu+1, hidden)
    #   W2p = [w2 ; b2]       (hidden+1, ns)
    w1p = jnp.concatenate(
        [w1x, w1u, b1.reshape(1, hidden)], axis=0
    ).astype(jnp.float32)
    w2p = jnp.concatenate(
        [w2, b2.reshape(1, num_states)], axis=0
    ).astype(jnp.float32)

    # batch tile: must divide batch and (if smaller than batch) be a multiple
    # of 8 (f32 sublane tile); otherwise fall back to the full batch.
    if batch_tile is None:
        batch_tile = batch
    if batch % batch_tile != 0 or (batch_tile < batch and batch_tile % 8 != 0):
        batch_tile = batch
    grid = (batch // batch_tile,)

    kernel = _make_neural_ode_kernel(segments, num_states, num_signals, hidden)

    return pl.pallas_call(
        kernel,
        out_shape=jax.ShapeDtypeStruct((T, batch, num_states), x.dtype),
        grid=grid,
        in_specs=[
            pl.BlockSpec((batch_tile, num_states), lambda i: (i, 0)),
            pl.BlockSpec((batch_tile, num_signals), lambda i: (i, 0)),
            pl.BlockSpec(w1p.shape, lambda i: (0, 0)),
            pl.BlockSpec(w2p.shape, lambda i: (0, 0)),
        ],
        out_specs=pl.BlockSpec((T, batch_tile, num_states), lambda i: (0, i, 0)),
        compiler_params=pltpu.CompilerParams(
            dimension_semantics=("parallel",),
        ),
    )(x, u, w1p, w2p)


# ---------------------------------------------------------------------------
# pure-JAX reference (for validation)
# ---------------------------------------------------------------------------
def neural_ode_reference(t, x, u, params, step_size=0.01):
    w1x, w1u, b1, w2, b2 = params
    if u is None:
        u = jnp.zeros((x.shape[0], w1u.shape[0]), x.dtype)
    c = u.astype(jnp.float32) @ w1u + b1

    def step(xc, h):
        hid = jnp.tanh(xc @ w1x + c)
        return xc + jnp.float32(h) * (hid @ w2 + b2)

    xs = [x]
    xc = x.astype(jnp.float32)
    for n_steps, h, h_rem in _segment_plan(t, step_size):
        for _ in range(n_steps):
            xc = step(xc, h)
        if h_rem > 0.0:
            xc = step(xc, h_rem)
        xs.append(xc.astype(x.dtype))
    return jnp.stack(xs, axis=0)


# ---------------------------------------------------------------------------
# deterministic synthetic parameters (shapes implied by MaskedNet MLP)
# ---------------------------------------------------------------------------
def init_params(key, num_states, num_signals, hidden):
    k1, k2, k3 = jax.random.split(key, 3)
    scale_in = 1.0 / jnp.sqrt(jnp.float32(num_states + num_signals))
    scale_hid = 1.0 / jnp.sqrt(jnp.float32(hidden))
    w1x = jax.random.normal(k1, (num_states, hidden), jnp.float32) * scale_in
    w1u = jax.random.normal(k2, (num_signals, hidden), jnp.float32) * scale_in
    b1 = jnp.zeros((1, hidden), jnp.float32)
    # small output scale -> stable dynamics (mimics stability_init intent)
    w2 = jax.random.normal(k3, (hidden, num_states), jnp.float32) * scale_hid * 0.1
    b2 = jnp.zeros((1, num_states), jnp.float32)
    return (w1x, w1u, b1, w2, b2)


if __name__ == "__main__":
    key = jax.random.PRNGKey(0)
    kx, ku, kp = jax.random.split(key, 3)

    batch = 16
    num_states = 16
    num_signals = 4
    hidden = 32
    step_size = 0.01
    # three requested time points -> two integration segments of 5 steps each
    t = jnp.array([0.0, 0.05, 0.1], dtype=jnp.float32)

    x = jax.random.normal(kx, (batch, num_states), jnp.float32)
    u = jax.random.normal(ku, (batch, num_signals), jnp.float32)
    params = init_params(kp, num_states, num_signals, hidden)

    out = neural_ode_forward(t, x, u, params, step_size=step_size, batch_tile=8)
    out = jax.block_until_ready(out)

    ref = neural_ode_reference(t, x, u, params, step_size=step_size)
    ref = jax.block_until_ready(ref)

    assert out.shape == (t.shape[0], batch, num_states), out.shape
    assert jnp.all(jnp.isfinite(out))
    assert jnp.allclose(out, ref, atol=1e-5, rtol=1e-5), (
        "mismatch vs pure-JAX reference"
    )

    # also exercise the u=None path (zero signals), single interval
    out2 = neural_ode_forward(t[:2], x, None, params, step_size=step_size)
    out2 = jax.block_until_ready(out2)
    ref2 = neural_ode_reference(t[:2], x, None, params, step_size=step_size)
    assert jnp.allclose(out2, ref2, atol=1e-5, rtol=1e-5)

    print("KERNEL_OK")
</pallas_src>

<mosaic_0001>
module attributes {stable_mosaic.version = 11 : i64} {
  func.func @kernel(%arg0: i32, %arg1: memref<8x16xf32, #tpu.memory_space<vmem>>, %arg2: memref<8x4xf32, #tpu.memory_space<vmem>>, %arg3: memref<21x32xf32, #tpu.memory_space<vmem>>, %arg4: memref<33x16xf32, #tpu.memory_space<vmem>>, %arg5: memref<3x8x16xf32, #tpu.memory_space<vmem>>) attributes {dimension_semantics = [#tpu.dimension_semantics<parallel>], iteration_bounds = array<i64: 2>, scalar_prefetch = 0 : i64, scratch_operands = 0 : i64, tpu.core_type = #tpu.core_type<tc>, window_params = [{transform_indices = @transform_0, window_bounds = array<i64: 8, 16>}, {transform_indices = @transform_1, window_bounds = array<i64: 8, 4>}, {pipeline_mode = #tpu.pipeline_mode<synchronous>, transform_indices = @transform_2, window_bounds = array<i64: 21, 32>}, {pipeline_mode = #tpu.pipeline_mode<synchronous>, transform_indices = @transform_3, window_bounds = array<i64: 33, 16>}, {transform_indices = @transform_4, window_bounds = array<i64: 3, 8, 16>}]} {
    %c0 = arith.constant 0 : index
    %c0_0 = arith.constant 0 : index
    %0 = vector.load %arg1[%c0, %c0_0] : memref<8x16xf32, #tpu.memory_space<vmem>>, vector<8x16xf32>
    %c0_1 = arith.constant 0 : index
    %c0_2 = arith.constant 0 : index
    %1 = vector.load %arg2[%c0_1, %c0_2] : memref<8x4xf32, #tpu.memory_space<vmem>>, vector<8x4xf32>
    %c0_3 = arith.constant 0 : index
    %c0_4 = arith.constant 0 : index
    %2 = vector.load %arg3[%c0_3, %c0_4] : memref<21x32xf32, #tpu.memory_space<vmem>>, vector<21x32xf32>
    %c0_5 = arith.constant 0 : index
    %c0_6 = arith.constant 0 : index
    %3 = vector.load %arg4[%c0_5, %c0_6] : memref<33x16xf32, #tpu.memory_space<vmem>>, vector<33x16xf32>
    %4 = vector.extract_strided_slice %2 {offsets = [0, 0], sizes = [16, 32], strides = [1, 1]} : vector<21x32xf32> to vector<16x32xf32>
    %5 = vector.extract_strided_slice %2 {offsets = [16, 0], sizes = [4, 32], strides = [1, 1]} : vector<21x32xf32> to vector<4x32xf32>
    %6 = vector.extract_strided_slice %2 {offsets = [20, 0], sizes = [1, 32], strides = [1, 1]} : vector<21x32xf32> to vector<1x32xf32>
    %7 = vector.extract_strided_slice %3 {offsets = [0, 0], sizes = [32, 16], strides = [1, 1]} : vector<33x16xf32> to vector<32x16xf32>
    %8 = vector.extract_strided_slice %3 {offsets = [32, 0], sizes = [1, 16], strides = [1, 1]} : vector<33x16xf32> to vector<1x16xf32>
    %cst = arith.constant dense<0.000000e+00> : vector<8x32xf32>
    %9 = tpu.matmul %1, %5, %cst {dimension_numbers = #tpu.dot_dimension_numbers<[1], [0], [0], [1], [0, 0, 1, 1], [], []>} : vector<8x4xf32>, vector<4x32xf32>, vector<8x32xf32> -> vector<8x32xf32>
    %10 = vector.broadcast %6 : vector<1x32xf32> to vector<8x32xf32>
    %11 = arith.addf %9, %10 : vector<8x32xf32>
    %c0_7 = arith.constant 0 : index
    %c0_8 = arith.constant 0 : index
    %c0_9 = arith.constant 0 : index
    %12 = vector.load %arg5[%c0_7, %c0_8, %c0_9] : memref<3x8x16xf32, #tpu.memory_space<vmem>>, vector<1x8x16xf32>
    %13 = vector.shape_cast %12 : vector<1x8x16xf32> to vector<8x16xf32>
    %14 = vector.shape_cast %0 : vector<8x16xf32> to vector<1x8x16xf32>
    tpu.vector_store %arg5[%c0_7, %c0_8, %c0_9], %14 {strides = array<i32>} : memref<3x8x16xf32, #tpu.memory_space<vmem>>, vector<1x8x16xf32>,
    %cst_10 = arith.constant 0.00999999977 : f32
    %15 = vector.broadcast %cst_10 : f32 to vector<32x16xf32>
    %16 = arith.mulf %15, %7 : vector<32x16xf32>
    %cst_11 = arith.constant 0.00999999977 : f32
    %17 = vector.broadcast %cst_11 : f32 to vector<1x16xf32>
    %18 = arith.mulf %17, %8 : vector<1x16xf32>
    %c0_i32 = arith.constant 0 : i32
    %cst_12 = arith.constant dense<0.000000e+00> : vector<8x32xf32>
    %19 = tpu.matmul %0, %4, %cst_12 {dimension_numbers = #tpu.dot_dimension_numbers<[1], [0], [0], [1], [0, 0, 1, 1], [], []>} : vector<8x16xf32>, vector<16x32xf32>, vector<8x32xf32> -> vector<8x32xf32>
    %20 = arith.addf %19, %11 : vector<8x32xf32>
    %21 = math.tanh %20 : vector<8x32xf32>
    %cst_13 = arith.constant dense<0.000000e+00> : vector<8x16xf32>
    %22 = tpu.matmul %21, %16, %cst_13 {dimension_numbers = #tpu.dot_dimension_numbers<[1], [0], [0], [1], [0, 0, 1, 1], [], []>} : vector<8x32xf32>, vector<32x16xf32>, vector<8x16xf32> -> vector<8x16xf32>
    %23 = arith.addf %0, %22 : vector<8x16xf32>
    %24 = vector.broadcast %18 : vector<1x16xf32> to vector<8x16xf32>
    %25 = arith.addf %23, %24 : vector<8x16xf32>
    %c1_i32 = arith.constant 1 : i32
    %cst_14 = arith.constant dense<0.000000e+00> : vector<8x32xf32>
    %26 = tpu.matmul %25, %4, %cst_14 {dimension_numbers = #tpu.dot_dimension_numbers<[1], [0], [0], [1], [0, 0, 1, 1], [], []>} : vector<8x16xf32>, vector<16x32xf32>, vector<8x32xf32> -> vector<8x32xf32>
    %27 = arith.addf %26, %11 : vector<8x32xf32>
    %28 = math.tanh %27 : vector<8x32xf32>
    %cst_15 = arith.constant dense<0.000000e+00> : vector<8x16xf32>
    %29 = tpu.matmul %28, %16, %cst_15 {dimension_numbers = #tpu.dot_dimension_numbers<[1], [0], [0], [1], [0, 0, 1, 1], [], []>} : vector<8x32xf32>, vector<32x16xf32>, vector<8x16xf32> -> vector<8x16xf32>
    %30 = arith.addf %25, %29 : vector<8x16xf32>
    %31 = vector.broadcast %18 : vector<1x16xf32> to vector<8x16xf32>
    %32 = arith.addf %30, %31 : vector<8x16xf32>
    %c2_i32 = arith.constant 2 : i32
    %cst_16 = arith.constant dense<0.000000e+00> : vector<8x32xf32>
    %33 = tpu.matmul %32, %4, %cst_16 {dimension_numbers = #tpu.dot_dimension_numbers<[1], [0], [0], [1], [0, 0, 1, 1], [], []>} : vector<8x16xf32>, vector<16x32xf32>, vector<8x32xf32> -> vector<8x32xf32>
    %34 = arith.addf %33, %11 : vector<8x32xf32>
    %35 = math.tanh %34 : vector<8x32xf32>
    %cst_17 = arith.constant dense<0.000000e+00> : vector<8x16xf32>
    %36 = tpu.matmul %35, %16, %cst_17 {dimension_numbers = #tpu.dot_dimension_numbers<[1], [0], [0], [1], [0, 0, 1, 1], [], []>} : vector<8x32xf32>, vector<32x16xf32>, vector<8x16xf32> -> vector<8x16xf32>
    %37 = arith.addf %32, %36 : vector<8x16xf32>
    %38 = vector.broadcast %18 : vector<1x16xf32> to vector<8x16xf32>
    %39 = arith.addf %37, %38 : vector<8x16xf32>
    %c3_i32 = arith.constant 3 : i32
    %cst_18 = arith.constant dense<0.000000e+00> : vector<8x32xf32>
    %40 = tpu.matmul %39, %4, %cst_18 {dimension_numbers = #tpu.dot_dimension_numbers<[1], [0], [0], [1], [0, 0, 1, 1], [], []>} : vector<8x16xf32>, vector<16x32xf32>, vector<8x32xf32> -> vector<8x32xf32>
    %41 = arith.addf %40, %11 : vector<8x32xf32>
    %42 = math.tanh %41 : vector<8x32xf32>
    %cst_19 = arith.constant dense<0.000000e+00> : vector<8x16xf32>
    %43 = tpu.matmul %42, %16, %cst_19 {dimension_numbers = #tpu.dot_dimension_numbers<[1], [0], [0], [1], [0, 0, 1, 1], [], []>} : vector<8x32xf32>, vector<32x16xf32>, vector<8x16xf32> -> vector<8x16xf32>
    %44 = arith.addf %39, %43 : vector<8x16xf32>
    %45 = vector.broadcast %18 : vector<1x16xf32> to vector<8x16xf32>
    %46 = arith.addf %44, %45 : vector<8x16xf32>
    %c4_i32 = arith.constant 4 : i32
    %cst_20 = arith.constant dense<0.000000e+00> : vector<8x32xf32>
    %47 = tpu.matmul %46, %4, %cst_20 {dimension_numbers = #tpu.dot_dimension_numbers<[1], [0], [0], [1], [0, 0, 1, 1], [], []>} : vector<8x16xf32>, vector<16x32xf32>, vector<8x32xf32> -> vector<8x32xf32>
    %48 = arith.addf %47, %11 : vector<8x32xf32>
    %49 = math.tanh %48 : vector<8x32xf32>
    %cst_21 = arith.constant dense<0.000000e+00> : vector<8x16xf32>
    %50 = tpu.matmul %49, %16, %cst_21 {dimension_numbers = #tpu.dot_dimension_numbers<[1], [0], [0], [1], [0, 0, 1, 1], [], []>} : vector<8x32xf32>, vector<32x16xf32>, vector<8x16xf32> -> vector<8x16xf32>
    %51 = arith.addf %46, %50 : vector<8x16xf32>
    %52 = vector.broadcast %18 : vector<1x16xf32> to vector<8x16xf32>
    %53 = arith.addf %51, %52 : vector<8x16xf32>
    %c1 = arith.constant 1 : index
    %c0_22 = arith.constant 0 : index
    %c0_23 = arith.constant 0 : index
    %54 = vector.load %arg5[%c1, %c0_22, %c0_23] : memref<3x8x16xf32, #tpu.memory_space<vmem>>, vector<1x8x16xf32>
    %55 = vector.shape_cast %54 : vector<1x8x16xf32> to vector<8x16xf32>
    %56 = vector.shape_cast %53 : vector<8x16xf32> to vector<1x8x16xf32>
    tpu.vector_store %arg5[%c1, %c0_22, %c0_23], %56 {strides = array<i32>} : memref<3x8x16xf32, #tpu.memory_space<vmem>>, vector<1x8x16xf32>,
    %cst_24 = arith.constant 0.00999999977 : f32
    %57 = vector.broadcast %cst_24 : f32 to vector<32x16xf32>
    %58 = arith.mulf %57, %7 : vector<32x16xf32>
    %cst_25 = arith.constant 0.00999999977 : f32
    %59 = vector.broadcast %cst_25 : f32 to vector<1x16xf32>
    %60 = arith.mulf %59, %8 : vector<1x16xf32>
    %c0_i32_26 = arith.constant 0 : i32
    %cst_27 = arith.constant dense<0.000000e+00> : vector<8x32xf32>
    %61 = tpu.matmul %53, %4, %cst_27 {dimension_numbers = #tpu.dot_dimension_numbers<[1], [0], [0], [1], [0, 0, 1, 1], [], []>} : vector<8x16xf32>, vector<16x32xf32>, vector<8x32xf32> -> vector<8x32xf32>
    %62 = arith.addf %61, %11 : vector<8x32xf32>
    %63 = math.tanh %62 : vector<8x32xf32>
    %cst_28 = arith.constant dense<0.000000e+00> : vector<8x16xf32>
    %64 = tpu.matmul %63, %58, %cst_28 {dimension_numbers = #tpu.dot_dimension_numbers<[1], [0], [0], [1], [0, 0, 1, 1], [], []>} : vector<8x32xf32>, vector<32x16xf32>, vector<8x16xf32> -> vector<8x16xf32>
    %65 = arith.addf %53, %64 : vector<8x16xf32>
    %66 = vector.broadcast %60 : vector<1x16xf32> to vector<8x16xf32>
    %67 = arith.addf %65, %66 : vector<8x16xf32>
    %c1_i32_29 = arith.constant 1 : i32
    %cst_30 = arith.constant dense<0.000000e+00> : vector<8x32xf32>
    %68 = tpu.matmul %67, %4, %cst_30 {dimension_numbers = #tpu.dot_dimension_numbers<[1], [0], [0], [1], [0, 0, 1, 1], [], []>} : vector<8x16xf32>, vector<16x32xf32>, vector<8x32xf32> -> vector<8x32xf32>
    %69 = arith.addf %68, %11 : vector<8x32xf32>
    %70 = math.tanh %69 : vector<8x32xf32>
    %cst_31 = arith.constant dense<0.000000e+00> : vector<8x16xf32>
    %71 = tpu.matmul %70, %58, %cst_31 {dimension_numbers = #tpu.dot_dimension_numbers<[1], [0], [0], [1], [0, 0, 1, 1], [], []>} : vector<8x32xf32>, vector<32x16xf32>, vector<8x16xf32> -> vector<8x16xf32>
    %72 = arith.addf %67, %71 : vector<8x16xf32>
    %73 = vector.broadcast %60 : vector<1x16xf32> to vector<8x16xf32>
    %74 = arith.addf %72, %73 : vector<8x16xf32>
    %c2_i32_32 = arith.constant 2 : i32
    %cst_33 = arith.constant dense<0.000000e+00> : vector<8x32xf32>
    %75 = tpu.matmul %74, %4, %cst_33 {dimension_numbers = #tpu.dot_dimension_numbers<[1], [0], [0], [1], [0, 0, 1, 1], [], []>} : vector<8x16xf32>, vector<16x32xf32>, vector<8x32xf32> -> vector<8x32xf32>
    %76 = arith.addf %75, %11 : vector<8x32xf32>
    %77 = math.tanh %76 : vector<8x32xf32>
    %cst_34 = arith.constant dense<0.000000e+00> : vector<8x16xf32>
    %78 = tpu.matmul %77, %58, %cst_34 {dimension_numbers = #tpu.dot_dimension_numbers<[1], [0], [0], [1], [0, 0, 1, 1], [], []>} : vector<8x32xf32>, vector<32x16xf32>, vector<8x16xf32> -> vector<8x16xf32>
    %79 = arith.addf %74, %78 : vector<8x16xf32>
    %80 = vector.broadcast %60 : vector<1x16xf32> to vector<8x16xf32>
    %81 = arith.addf %79, %80 : vector<8x16xf32>
    %c3_i32_35 = arith.constant 3 : i32
    %cst_36 = arith.constant dense<0.000000e+00> : vector<8x32xf32>
    %82 = tpu.matmul %81, %4, %cst_36 {dimension_numbers = #tpu.dot_dimension_numbers<[1], [0], [0], [1], [0, 0, 1, 1], [], []>} : vector<8x16xf32>, vector<16x32xf32>, vector<8x32xf32> -> vector<8x32xf32>
    %83 = arith.addf %82, %11 : vector<8x32xf32>
    %84 = math.tanh %83 : vector<8x32xf32>
    %cst_37 = arith.constant dense<0.000000e+00> : vector<8x16xf32>
    %85 = tpu.matmul %84, %58, %cst_37 {dimension_numbers = #tpu.dot_dimension_numbers<[1], [0], [0], [1], [0, 0, 1, 1], [], []>} : vector<8x32xf32>, vector<32x16xf32>, vector<8x16xf32> -> vector<8x16xf32>
    %86 = arith.addf %81, %85 : vector<8x16xf32>
    %87 = vector.broadcast %60 : vector<1x16xf32> to vector<8x16xf32>
    %88 = arith.addf %86, %87 : vector<8x16xf32>
    %c4_i32_38 = arith.constant 4 : i32
    %cst_39 = arith.constant dense<0.000000e+00> : vector<8x32xf32>
    %89 = tpu.matmul %88, %4, %cst_39 {dimension_numbers = #tpu.dot_dimension_numbers<[1], [0], [0], [1], [0, 0, 1, 1], [], []>} : vector<8x16xf32>, vector<16x32xf32>, vector<8x32xf32> -> vector<8x32xf32>
    %90 = arith.addf %89, %11 : vector<8x32xf32>
    %91 = math.tanh %90 : vector<8x32xf32>
    %cst_40 = arith.constant dense<0.000000e+00> : vector<8x16xf32>
    %92 = tpu.matmul %91, %58, %cst_40 {dimension_numbers = #tpu.dot_dimension_numbers<[1], [0], [0], [1], [0, 0, 1, 1], [], []>} : vector<8x32xf32>, vector<32x16xf32>, vector<8x16xf32> -> vector<8x16xf32>
    %93 = arith.addf %88, %92 : vector<8x16xf32>
    %94 = vector.broadcast %60 : vector<1x16xf32> to vector<8x16xf32>
    %95 = arith.addf %93, %94 : vector<8x16xf32>
    %c2 = arith.constant 2 : index
    %c0_41 = arith.constant 0 : index
    %c0_42 = arith.constant 0 : index
    %96 = vector.load %arg5[%c2, %c0_41, %c0_42] : memref<3x8x16xf32, #tpu.memory_space<vmem>>, vector<1x8x16xf32>
    %97 = vector.shape_cast %96 : vector<1x8x16xf32> to vector<8x16xf32>
    %98 = vector.shape_cast %95 : vector<8x16xf32> to vector<1x8x16xf32>
    tpu.vector_store %arg5[%c2, %c0_41, %c0_42], %98 {strides = array<i32>} : memref<3x8x16xf32, #tpu.memory_space<vmem>>, vector<1x8x16xf32>,
    return
  }
  func.func @transform_0(%arg0: i32) -> (i32, i32) {
    %c0_i32 = arith.constant 0 : i32
    %c0_i32_0 = arith.constant 0 : i32
    return %arg0, %c0_i32 : i32, i32
  }
  func.func @transform_1(%arg0: i32) -> (i32, i32) {
    %c0_i32 = arith.constant 0 : i32
    %c0_i32_0 = arith.constant 0 : i32
    return %arg0, %c0_i32 : i32, i32
  }
  func.func @transform_2(%arg0: i32) -> (i32, i32) {
    %c0_i32 = arith.constant 0 : i32
    %c0_i32_0 = arith.constant 0 : i32
    %c0_i32_1 = arith.constant 0 : i32
    return %c0_i32, %c0_i32_0 : i32, i32
  }
  func.func @transform_3(%arg0: i32) -> (i32, i32) {
    %c0_i32 = arith.constant 0 : i32
    %c0_i32_0 = arith.constant 0 : i32
    %c0_i32_1 = arith.constant 0 : i32
    return %c0_i32, %c0_i32_0 : i32, i32
  }
  func.func @transform_4(%arg0: i32) -> (i32, i32, i32) {
    %c0_i32 = arith.constant 0 : i32
    %c0_i32_0 = arith.constant 0 : i32
    %c0_i32_1 = arith.constant 0 : i32
    return %c0_i32, %arg0, %c0_i32_0 : i32, i32, i32
  }
}

</mosaic_0001>

<llo_original>
// kernel: tpu_custom_call.1
$region0: #{tpu_custom_call.1}
  #allocation0 [shape = 'u32[]', space=smem, size = 0x4, offset = 0x4, fixed_abs, tag = 'smem constant byte address 0x4 - core index']
  #allocation1 [shape = 'u32[72,128]{1,0:T(1,128)}', space=vmem, size = 0x9000, scoped, tag = 'internal scratch']
  %s0 = inlined_call_operand.vmem [shape: f32[16,16], index: 0, kind: input, shape index: {}]
  %s1 = inlined_call_operand.vmem [shape: f32[16,4], index: 1, kind: input, shape index: {}]
  %s2 = inlined_call_operand.vmem [shape: f32[21,32], index: 2, kind: input, shape index: {}]
  %s3 = inlined_call_operand.vmem [shape: f32[33,16], index: 3, kind: input, shape index: {}]
  %s4 = inlined_call_operand.hbm [shape: f32[3,16,16], index: 4, kind: output, shape index: {}]
  %s5 = sld [smem:[#allocation0]]
  $region49: #{tpu_custom_call.1} parent=0
    _
  %s7 = ssub.s32 1, %s5
  %s8 = scalar_select 0, %s7, %s5
  $region1: #{tpu_custom_call.1} parent=0
    #allocation2 [shape = 'u8[24576]{0}', space=vmem, size = 0x6000, scoped, tag = 'output window, operand 0']
    #allocation3 [shape = 's32[2]{0}', space=sflag, size = 0x8, scoped, tag = 'scoped memory for tpu_custom_call.1']
    %9 = vsyncpa [#allocation3], 0
    %s10 = scalar_lea.sflag [#allocation3], 1
    %11 = vsyncpa %s10, 0
    loop: start=0, step=1, limit=4
    $region2: #{tpu_custom_call.1} parent=1 // loop_pre_header
      _
    $region3: #{tpu_custom_call.1} parent=1 // loop_header
      %s13 = sphi 0, %s17
      %p14 = scmp.ge.s32.totalorder %s13, 4
      %s23 = sphi 0, %s25
      %s26 = sphi 0, %s23
      %s27 = sphi 0, %s26
      %s43 = sphi 0, %s27
      %s49 = sphi 0, %s51
      %s52 = sphi 0, %s49
      %s53 = sphi 0, %s52
      %s69 = sphi 0, %s53
      %s73 = sphi 0, %s73
      %s75 = sphi 0, %s73
      %s76 = sphi 0, %s75
      %s90 = sphi 0, %s76
      %s94 = sphi 0, %s94
      %s96 = sphi 0, %s94
      %s97 = sphi 0, %s96
      %s111 = sphi 0, %s97
      %s117 = sphi 0, %s119
      %s120 = sphi 0, %s117
      %s121 = sphi 0, %s120
      %s137 = sphi 0, %s121
    $region4: #{tpu_custom_call.1} parent=1 // loop_header_branch
      %16 = sbr.rel (%p14) target = $region8
    $region5: #{tpu_custom_call.1} parent=1 // loop_body
      %s18 = ssub.s32 %s13, 1
      %s19 = ssub.s32 %s13, 2
      %s20 = sadd.s32 %s13, 1
      %s21 = ssub.s32 %s13, %s20
      %p22 = scmp.eq.s32.totalorder %s21, 0
      %s24 = sadd.s32 %s23, 1
      %s25 = scalar_select %p22, %s23, %s24
      %p28 = pneg %p22
      %p29 = scmp.eq.s32.totalorder %s13, 1
      %p30 = por %p28, %p29
      %p31 = scmp.ne.s32.totalorder %s23, %s26
      %p32 = scmp.eq.s32.totalorder %s13, 0
      %p33 = por %p31, %p32
      %p34 = scmp.ne.s32.totalorder %s23, %s26
      %p35 = scmp.eq.s32.totalorder %s18, 1
      %p36 = por %p34, %p35
      %p37 = scmp.ne.s32.totalorder %s26, %s27
      %p38 = scmp.eq.s32.totalorder %s18, 0
      %p39 = por %p37, %p38
      %p40 = scmp.ne.s32.totalorder %s26, %s27
      %p41 = scmp.eq.s32.totalorder %s19, 1
      %p42 = por %p40, %p41
      %p44 = scmp.ne.s32.totalorder %s27, %s43
      %p45 = scmp.eq.s32.totalorder %s19, 0
      %p46 = por %p44, %p45
      %s47 = ssub.s32 %s13, %s20
      %p48 = scmp.eq.s32.totalorder %s47, 0
      %s50 = sadd.s32 %s49, 1
      %s51 = scalar_select %p48, %s49, %s50
      %p54 = pneg %p48
      %p55 = scmp.eq.s32.totalorder %s13, 1
      %p56 = por %p54, %p55
      %p57 = scmp.ne.s32.totalorder %s49, %s52
      %p58 = scmp.eq.s32.totalorder %s13, 0
      %p59 = por %p57, %p58
      %p60 = scmp.ne.s32.totalorder %s49, %s52
      %p61 = scmp.eq.s32.totalorder %s18, 1
      %p62 = por %p60, %p61
      %p63 = scmp.ne.s32.totalorder %s52, %s53
      %p64 = scmp.eq.s32.totalorder %s18, 0
      %p65 = por %p63, %p64
      %p66 = scmp.ne.s32.totalorder %s52, %s53
      %p67 = scmp.eq.s32.totalorder %s19, 1
      %p68 = por %p66, %p67
      %p70 = scmp.ne.s32.totalorder %s53, %s69
      %p71 = scmp.eq.s32.totalorder %s19, 0
      %p72 = por %p70, %p71
      %s74 = sadd.s32 %s73, 1
      %p77 = scmp.eq.s32.totalorder %s13, 1
      %p78 = scmp.ne.s32.totalorder %s73, %s75
      %p79 = scmp.eq.s32.totalorder %s13, 0
      %p80 = por %p78, %p79
      %p81 = scmp.ne.s32.totalorder %s73, %s75
      %p82 = scmp.eq.s32.totalorder %s18, 1
      %p83 = por %p81, %p82
      %p84 = scmp.ne.s32.totalorder %s75, %s76
      %p85 = scmp.eq.s32.totalorder %s18, 0
      %p86 = por %p84, %p85
      %p87 = scmp.ne.s32.totalorder %s75, %s76
      %p88 = scmp.eq.s32.totalorder %s19, 1
      %p89 = por %p87, %p88
      %p91 = scmp.ne.s32.totalorder %s76, %s90
      %p92 = scmp.eq.s32.totalorder %s19, 0
      %p93 = por %p91, %p92
      %s95 = sadd.s32 %s94, 1
      %p98 = scmp.eq.s32.totalorder %s13, 1
      %p99 = scmp.ne.s32.totalorder %s94, %s96
      %p100 = scmp.eq.s32.totalorder %s13, 0
      %p101 = por %p99, %p100
      %p102 = scmp.ne.s32.totalorder %s94, %s96
      %p103 = scmp.eq.s32.totalorder %s18, 1
      %p104 = por %p102, %p103
      %p105 = scmp.ne.s32.totalorder %s96, %s97
      %p106 = scmp.eq.s32.totalorder %s18, 0
      %p107 = por %p105, %p106
      %p108 = scmp.ne.s32.totalorder %s96, %s97
      %p109 = scmp.eq.s32.totalorder %s19, 1
      %p110 = por %p108, %p109
      %p112 = scmp.ne.s32.totalorder %s97, %s111
      %p113 = scmp.eq.s32.totalorder %s19, 0
      %p114 = por %p112, %p113
      %s115 = ssub.s32 %s13, %s20
      %p116 = scmp.eq.s32.totalorder %s115, 0
      %s118 = sadd.s32 %s117, 1
      %s119 = scalar_select %p116, %s117, %s118
      %p122 = pneg %p116
      %p123 = scmp.eq.s32.totalorder %s13, 1
      %p124 = por %p122, %p123
      %p125 = scmp.ne.s32.totalorder %s117, %s120
      %p126 = scmp.eq.s32.totalorder %s13, 0
      %p127 = por %p125, %p126
      %p128 = scmp.ne.s32.totalorder %s117, %s120
      %p129 = scmp.eq.s32.totalorder %s18, 1
      %p130 = por %p128, %p129
      %p131 = scmp.ne.s32.totalorder %s120, %s121
      %p132 = scmp.eq.s32.totalorder %s18, 0
      %p133 = por %p131, %p132
      %p134 = scmp.ne.s32.totalorder %s120, %s121
      %p135 = scmp.eq.s32.totalorder %s19, 1
      %p136 = por %p134, %p135
      %p138 = scmp.ne.s32.totalorder %s121, %s137
      %p139 = scmp.eq.s32.totalorder %s19, 0
      %p140 = por %p138, %p139
      %p141 = scmp.le.s32.totalorder 1, %s13
      %p142 = scmp.lt.s32.totalorder %s13, 3
      %p143 = pnand %p141, %p142
      %p144 = pneg %p143
      // Predicated region
      $region9: #{tpu_custom_call.1} parent=5 // pred_check
        _
      $region10: #{tpu_custom_call.1} parent=5 // pred_check_branch
        %146 = sbr.rel (%p143) target = $region12
      $region11: #{tpu_custom_call.1} parent=5 // pred_region
        %s147 = ssub.s32 %s13, 1
        // Predicated region
        $region13: #{tpu_custom_call.1} parent=11 // pred_check
          %p148 = pneg %p86
        $region14: #{tpu_custom_call.1} parent=11 // pred_check_branch
          %150 = sbr.rel (%p148) target = $region16
        $region15: #{tpu_custom_call.1} parent=11 // pred_region
          _
        $region16: #{tpu_custom_call.1} parent=11 // pred_fallthru
          _
        // Predicated region
        $region17: #{tpu_custom_call.1} parent=11 // pred_check
          %p151 = pneg %p107
        $region18: #{tpu_custom_call.1} parent=11 // pred_check_branch
          %153 = sbr.rel (%p151) target = $region20
        $region19: #{tpu_custom_call.1} parent=11 // pred_region
          _
        $region20: #{tpu_custom_call.1} parent=11 // pred_fallthru
          _
      $region12: #{tpu_custom_call.1} parent=5 // pred_fallthru
        _
      %p154 = scmp.lt.s32.totalorder %s13, 2
      // Predicated region
      $region21: #{tpu_custom_call.1} parent=5 // pred_check
        %p155 = pneg %p154
      $region22: #{tpu_custom_call.1} parent=5 // pred_check_branch
        %157 = sbr.rel (%p155) target = $region24
      $region23: #{tpu_custom_call.1} parent=5 // pred_region
        // Predicated region
        $region25: #{tpu_custom_call.1} parent=23 // pred_check
          %p158 = pneg %p33
        $region26: #{tpu_custom_call.1} parent=23 // pred_check_branch
          %160 = sbr.rel (%p158) target = $region28
        $region27: #{tpu_custom_call.1} parent=23 // pred_region
          %p161 = scmp.lt.s32.totalorder %s13, 1
          %s162 = scalar_select %p161, %s13, 1
          %s163 = smul.addr %s162, 8
          %s164 = scalar_lea.vmem %s0, %s163
        $region28: #{tpu_custom_call.1} parent=23 // pred_fallthru
          _
        // Predicated region
        $region29: #{tpu_custom_call.1} parent=23 // pred_check
          %p165 = pneg %p59
        $region30: #{tpu_custom_call.1} parent=23 // pred_check_branch
          %167 = sbr.rel (%p165) target = $region32
        $region31: #{tpu_custom_call.1} parent=23 // pred_region
          %p168 = scmp.lt.s32.totalorder %s13, 1
          %s169 = scalar_select %p168, %s13, 1
          %s170 = smul.addr %s169, 8
          %s171 = scalar_lea.vmem %s1, %s170
        $region32: #{tpu_custom_call.1} parent=23 // pred_fallthru
          _
      $region24: #{tpu_custom_call.1} parent=5 // pred_fallthru
        _
      %p172 = scmp.le.s32.totalorder 1, %s13
      %p173 = scmp.lt.s32.totalorder %s13, 3
      %p174 = pnand %p172, %p173
      %p175 = pneg %p174
      // Predicated region
      $region33: #{tpu_custom_call.1} parent=5 // pred_check
        _
      $region34: #{tpu_custom_call.1} parent=5 // pred_check_branch
        %177 = sbr.rel (%p174) target = $region36
      $region35: #{tpu_custom_call.1} parent=5 // pred_region
        %s178 = ssub.s32 %s13, 1
        %p179 = scmp.lt.s32.totalorder %s18, 1
        %s180 = scalar_select %p179, %s18, 1
        %s181 = smul.addr %s180, 8
        %s182 = scalar_lea.vmem %s0, %s181
        %p183 = pneg %p39
        %p184 = pneg %p36
        %p185 = scmp.lt.s32.totalorder %s18, 1
        %s186 = scalar_select %p185, %s18, 1
        %s187 = smul.addr %s186, 8
        %s188 = scalar_lea.vmem %s1, %s187
        %p189 = pneg %p65
        %p190 = pneg %p62
        %p191 = pneg %p86
        %p192 = pneg %p83
        %p193 = pneg %p107
        %p194 = pneg %p104
        %p195 = pneg %p133
        %p196 = pneg %p130
        %s197 = sand.u32 %s120, 1
        %s198 = scalar_lea.sflag [#allocation3], %s197
        %s199 = sand.u32 %s120, 1
        %s200 = smul.addr %s199, 24
        %s201 = scalar_lea.vmem [#allocation2], %s200
        %p202 = scmp.lt.s32.totalorder %s18, 1
        %s203 = scalar_select %p202, %s18, 1
        %s204 = smul.addr %s203, 8
        %s205 = scalar_lea.vmem %s0, %s204
        %p206 = scmp.lt.s32.totalorder %s18, 1
        %s207 = scalar_select %p206, %s18, 1
        %s208 = smul.addr %s207, 8
        %s209 = scalar_lea.vmem %s1, %s208
        %v210 = vld [vmem:[%s205] sm:$0xff]
        %v211 = vld [vmem:[%s209] sm:$0xff]
        %v212 = vld [vmem:[%s2] sm:$0xff]
        %v213 = vld [vmem:[%s2 + $0x8] sm:$0xff]
        %v214 = vld [vmem:[%s2 + $0x10] sm:$0x1f]
        %v215 = vld [vmem:[%s3] sm:$0xff]
        %v216 = vld [vmem:[%s3 + $0x8] sm:$0xff]
        %v217 = vld [vmem:[%s3 + $0x10] sm:$0xff]
        %v218 = vld [vmem:[%s3 + $0x18] sm:$0xff]
        %v219 = vld [vmem:[%s3 + $0x20] sm:$0x1]
        %v220 = vperm.slane %v214, 4
        %vm221 = vcmask 31744
        %v223 = vsel %vm221, %v211, 0
        %vm225 = vcmask 1043456
        %v227 = vsel %vm225, %v214, 0
        %229 = vmatpush.msra.mxu0 0.0
        %230 = vmatpush.msra.mxu0 0.0
        %231 = vmatpush.msra.mxu0 0.0
        %232 = vmatpush.msra.mxu0 0.0
        %233 = vmatpush.msra.mxu0 0.0
        %234 = vmatpush.msra.mxu0 0.0
        %235 = vmatpush.msra.mxu0 0.0
        %236 = vmatpush.msra.mxu0 0.0
        %237 = vmatpush.msra.mxu0 0.0
        %238 = vmatpush.msra.mxu0 0.0
        %239 = vmatpush.msra.mxu0 0.0
        %240 = vmatpush.msra.mxu0 0.0
        %241 = vmatpush.msra.mxu0 0.0
        %242 = vmatpush.msra.mxu0 0.0
        %243 = vmatpush.msra.mxu0 0.0
        %244 = vmatpush.msra.mxu0 %v227
        %245 = vmatmul.f32.gmra.mxu0 %v223
        %v246 = vpop.f32.mrf.mxu0
        %v247 = vadd.f32 %v220, %v246
        %248 = vdwg.mxu0
        %vm249 = vcmask 130048
        %250 = vst.msk [vmem:[%s201] sm:$0xff] %vm249, %v210
        %v251 = vmul.f32 %v215, 0.01
        %v252 = vmul.f32 %v216, 0.01
        %v253 = vmul.f32 %v217, 0.01
        %v254 = vmul.f32 %v218, 0.01
        %v255 = vmul.f32 %v219, 0.01
        %v257 = vsel %vm249, %v210, 0
        %259 = vmatpush.msra.mxu0 0.0
        %260 = vmatpush.msra.mxu0 0.0
        %261 = vmatpush.msra.mxu0 0.0
        %262 = vmatpush.msra.mxu0 0.0
        %263 = vmatpush.msra.mxu0 0.0
        %264 = vmatpush.msra.mxu0 0.0
        %265 = vmatpush.msra.mxu0 0.0
        %266 = vmatpush.msra.mxu0 0.0
        %267 = vmatpush.msra.mxu0 0.0
        %268 = vmatpush.msra.mxu0 0.0
        %269 = vmatpush.msra.mxu0 0.0
        %270 = vmatpush.msra.mxu0 0.0
        %271 = vmatpush.msra.mxu0 0.0
        %272 = vmatpush.msra.mxu0 0.0
        %273 = vmatpush.msra.mxu0 %v213
        %274 = vmatpush.msra.mxu0 %v212
        %275 = vmatmul.f32.gmra.mxu0 %v257
        %v276 = vpop.f32.mrf.mxu0
        %v277 = vadd.f32 %v247, %v276
        %278 = vdwg.mxu0
        %v279 = vtanh.pop %v277
        %vm280 = vcmask 261120
        %v282 = vsel %vm280, %v279, 0
        %284 = vmatpush.msra.mxu0 0.0
        %285 = vmatpush.msra.mxu0 0.0
        %286 = vmatpush.msra.mxu0 0.0
        %287 = vmatpush.msra.mxu0 0.0
        %288 = vmatpush.msra.mxu0 0.0
        %289 = vmatpush.msra.mxu0 0.0
        %290 = vmatpush.msra.mxu0 0.0
        %291 = vmatpush.msra.mxu0 0.0
        %292 = vmatpush.msra.mxu0 0.0
        %293 = vmatpush.msra.mxu0 0.0
        %294 = vmatpush.msra.mxu0 0.0
        %295 = vmatpush.msra.mxu0 0.0
        %296 = vmatpush.msra.mxu0 %v254
        %297 = vmatpush.msra.mxu0 %v253
        %298 = vmatpush.msra.mxu0 %v252
        %299 = vmatpush.msra.mxu0 %v251
        %300 = vmatmul.f32.gmra.mxu0 %v282
        %v301 = vpop.f32.mrf.mxu0
        %v302 = vadd.f32 0.0, %v301
        %303 = vdwg.mxu0
        %v304 = vadd.f32 %v210, %v302
        %v305 = vperm.slane %v255, 0
        %v306 = vadd.f32 %v304, %v305
        %v308 = vsel %vm249, %v306, 0
        %310 = vmatpush.msra.mxu0 0.0
        %311 = vmatpush.msra.mxu0 0.0
        %312 = vmatpush.msra.mxu0 0.0
        %313 = vmatpush.msra.mxu0 0.0
        %314 = vmatpush.msra.mxu0 0.0
        %315 = vmatpush.msra.mxu0 0.0
        %316 = vmatpush.msra.mxu0 0.0
        %317 = vmatpush.msra.mxu0 0.0
        %318 = vmatpush.msra.mxu0 0.0
        %319 = vmatpush.msra.mxu0 0.0
        %320 = vmatpush.msra.mxu0 0.0
        %321 = vmatpush.msra.mxu0 0.0
        %322 = vmatpush.msra.mxu0 0.0
        %323 = vmatpush.msra.mxu0 0.0
        %324 = vmatpush.msra.mxu0 %v213
        %325 = vmatpush.msra.mxu0 %v212
        %326 = vmatmul.f32.gmra.mxu0 %v308
        %v327 = vpop.f32.mrf.mxu0
        %v328 = vadd.f32 %v247, %v327
        %329 = vdwg.mxu0
        %v330 = vtanh.pop %v328
        %v332 = vsel %vm280, %v330, 0
        %334 = vmatpush.msra.mxu0 0.0
        %335 = vmatpush.msra.mxu0 0.0
        %336 = vmatpush.msra.mxu0 0.0
        %337 = vmatpush.msra.mxu0 0.0
        %338 = vmatpush.msra.mxu0 0.0
        %339 = vmatpush.msra.mxu0 0.0
        %340 = vmatpush.msra.mxu0 0.0
        %341 = vmatpush.msra.mxu0 0.0
        %342 = vmatpush.msra.mxu0 0.0
        %343 = vmatpush.msra.mxu0 0.0
        %344 = vmatpush.msra.mxu0 0.0
        %345 = vmatpush.msra.mxu0 0.0
        %346 = vmatpush.msra.mxu0 %v254
        %347 = vmatpush.msra.mxu0 %v253
        %348 = vmatpush.msra.mxu0 %v252
        %349 = vmatpush.msra.mxu0 %v251
        %350 = vmatmul.f32.gmra.mxu0 %v332
        %v351 = vpop.f32.mrf.mxu0
        %v352 = vadd.f32 0.0, %v351
        %353 = vdwg.mxu0
        %v354 = vadd.f32 %v306, %v352
        %v355 = vadd.f32 %v354, %v305
        %v357 = vsel %vm249, %v355, 0
        %359 = vmatpush.msra.mxu0 0.0
        %360 = vmatpush.msra.mxu0 0.0
        %361 = vmatpush.msra.mxu0 0.0
        %362 = vmatpush.msra.mxu0 0.0
        %363 = vmatpush.msra.mxu0 0.0
        %364 = vmatpush.msra.mxu0 0.0
        %365 = vmatpush.msra.mxu0 0.0
        %366 = vmatpush.msra.mxu0 0.0
        %367 = vmatpush.msra.mxu0 0.0
        %368 = vmatpush.msra.mxu0 0.0
        %369 = vmatpush.msra.mxu0 0.0
        %370 = vmatpush.msra.mxu0 0.0
        %371 = vmatpush.msra.mxu0 0.0
        %372 = vmatpush.msra.mxu0 0.0
        %373 = vmatpush.msra.mxu0 %v213
        %374 = vmatpush.msra.mxu0 %v212
        %375 = vmatmul.f32.gmra.mxu0 %v357
        %v376 = vpop.f32.mrf.mxu0
        %v377 = vadd.f32 %v247, %v376
        %378 = vdwg.mxu0
        %v379 = vtanh.pop %v377
        %v381 = vsel %vm280, %v379, 0
        %383 = vmatpush.msra.mxu0 0.0
        %384 = vmatpush.msra.mxu0 0.0
        %385 = vmatpush.msra.mxu0 0.0
        %386 = vmatpush.msra.mxu0 0.0
        %387 = vmatpush.msra.mxu0 0.0
        %388 = vmatpush.msra.mxu0 0.0
        %389 = vmatpush.msra.mxu0 0.0
        %390 = vmatpush.msra.mxu0 0.0
        %391 = vmatpush.msra.mxu0 0.0
        %392 = vmatpush.msra.mxu0 0.0
        %393 = vmatpush.msra.mxu0 0.0
        %394 = vmatpush.msra.mxu0 0.0
        %395 = vmatpush.msra.mxu0 %v254
        %396 = vmatpush.msra.mxu0 %v253
        %397 = vmatpush.msra.mxu0 %v252
        %398 = vmatpush.msra.mxu0 %v251
        %399 = vmatmul.f32.gmra.mxu0 %v381
        %v400 = vpop.f32.mrf.mxu0
        %v401 = vadd.f32 0.0, %v400
        %402 = vdwg.mxu0
        %v403 = vadd.f32 %v355, %v401
        %v404 = vadd.f32 %v403, %v305
        %v406 = vsel %vm249, %v404, 0
        %408 = vmatpush.msra.mxu0 0.0
        %409 = vmatpush.msra.mxu0 0.0
        %410 = vmatpush.msra.mxu0 0.0
        %411 = vmatpush.msra.mxu0 0.0
        %412 = vmatpush.msra.mxu0 0.0
        %413 = vmatpush.msra.mxu0 0.0
        %414 = vmatpush.msra.mxu0 0.0
        %415 = vmatpush.msra.mxu0 0.0
        %416 = vmatpush.msra.mxu0 0.0
        %417 = vmatpush.msra.mxu0 0.0
        %418 = vmatpush.msra.mxu0 0.0
        %419 = vmatpush.msra.mxu0 0.0
        %420 = vmatpush.msra.mxu0 0.0
        %421 = vmatpush.msra.mxu0 0.0
        %422 = vmatpush.msra.mxu0 %v213
        %423 = vmatpush.msra.mxu0 %v212
        %424 = vmatmul.f32.gmra.mxu0 %v406
        %v425 = vpop.f32.mrf.mxu0
        %v426 = vadd.f32 %v247, %v425
        %427 = vdwg.mxu0
        %v428 = vtanh.pop %v426
        %v430 = vsel %vm280, %v428, 0
        %432 = vmatpush.msra.mxu0 0.0
        %433 = vmatpush.msra.mxu0 0.0
        %434 = vmatpush.msra.mxu0 0.0
        %435 = vmatpush.msra.mxu0 0.0
        %436 = vmatpush.msra.mxu0 0.0
        %437 = vmatpush.msra.mxu0 0.0
        %438 = vmatpush.msra.mxu0 0.0
        %439 = vmatpush.msra.mxu0 0.0
        %440 = vmatpush.msra.mxu0 0.0
        %441 = vmatpush.msra.mxu0 0.0
        %442 = vmatpush.msra.mxu0 0.0
        %443 = vmatpush.msra.mxu0 0.0
        %444 = vmatpush.msra.mxu0 %v254
        %445 = vmatpush.msra.mxu0 %v253
        %446 = vmatpush.msra.mxu0 %v252
        %447 = vmatpush.msra.mxu0 %v251
        %448 = vmatmul.f32.gmra.mxu0 %v430
        %v449 = vpop.f32.mrf.mxu0
        %v450 = vadd.f32 0.0, %v449
        %451 = vdwg.mxu0
        %v452 = vadd.f32 %v404, %v450
        %v453 = vadd.f32 %v452, %v305
        %v455 = vsel %vm249, %v453, 0
        %457 = vmatpush.msra.mxu0 0.0
        %458 = vmatpush.msra.mxu0 0.0
        %459 = vmatpush.msra.mxu0 0.0
        %460 = vmatpush.msra.mxu0 0.0
        %461 = vmatpush.msra.mxu0 0.0
        %462 = vmatpush.msra.mxu0 0.0
        %463 = vmatpush.msra.mxu0 0.0
        %464 = vmatpush.msra.mxu0 0.0
        %465 = vmatpush.msra.mxu0 0.0
        %466 = vmatpush.msra.mxu0 0.0
        %467 = vmatpush.msra.mxu0 0.0
        %468 = vmatpush.msra.mxu0 0.0
        %469 = vmatpush.msra.mxu0 0.0
        %470 = vmatpush.msra.mxu0 0.0
        %471 = vmatpush.msra.mxu0 %v213
        %472 = vmatpush.msra.mxu0 %v212
        %473 = vmatmul.f32.gmra.mxu0 %v455
        %v474 = vpop.f32.mrf.mxu0
        %v475 = vadd.f32 %v247, %v474
        %476 = vdwg.mxu0
        %v477 = vtanh.pop %v475
        %v479 = vsel %vm280, %v477, 0
        %481 = vmatpush.msra.mxu0 0.0
        %482 = vmatpush.msra.mxu0 0.0
        %483 = vmatpush.msra.mxu0 0.0
        %484 = vmatpush.msra.mxu0 0.0
        %485 = vmatpush.msra.mxu0 0.0
        %486 = vmatpush.msra.mxu0 0.0
        %487 = vmatpush.msra.mxu0 0.0
        %488 = vmatpush.msra.mxu0 0.0
        %489 = vmatpush.msra.mxu0 0.0
        %490 = vmatpush.msra.mxu0 0.0
        %491 = vmatpush.msra.mxu0 0.0
        %492 = vmatpush.msra.mxu0 0.0
        %493 = vmatpush.msra.mxu0 %v254
        %494 = vmatpush.msra.mxu0 %v253
        %495 = vmatpush.msra.mxu0 %v252
        %496 = vmatpush.msra.mxu0 %v251
        %497 = vmatmul.f32.gmra.mxu0 %v479
        %v498 = vpop.f32.mrf.mxu0
        %v499 = vadd.f32 0.0, %v498
        %500 = vdwg.mxu0
        %v501 = vadd.f32 %v453, %v499
        %v502 = vadd.f32 %v501, %v305
        %s503 = scalar_lea.vmem %s201, 8 [#allocation2]
        %504 = vst.msk [vmem:[%s503] sm:$0xff] %vm249, %v502
        %v506 = vsel %vm249, %v502, 0
        %508 = vmatpush.msra.mxu0 0.0
        %509 = vmatpush.msra.mxu0 0.0
        %510 = vmatpush.msra.mxu0 0.0
        %511 = vmatpush.msra.mxu0 0.0
        %512 = vmatpush.msra.mxu0 0.0
        %513 = vmatpush.msra.mxu0 0.0
        %514 = vmatpush.msra.mxu0 0.0
        %515 = vmatpush.msra.mxu0 0.0
        %516 = vmatpush.msra.mxu0 0.0
        %517 = vmatpush.msra.mxu0 0.0
        %518 = vmatpush.msra.mxu0 0.0
        %519 = vmatpush.msra.mxu0 0.0
        %520 = vmatpush.msra.mxu0 0.0
        %521 = vmatpush.msra.mxu0 0.0
        %522 = vmatpush.msra.mxu0 %v213
        %523 = vmatpush.msra.mxu0 %v212
        %524 = vmatmul.f32.gmra.mxu0 %v506
        %v525 = vpop.f32.mrf.mxu0
        %v526 = vadd.f32 %v247, %v525
        %527 = vdwg.mxu0
        %v528 = vtanh.pop %v526
        %v530 = vsel %vm280, %v528, 0
        %532 = vmatpush.msra.mxu0 0.0
        %533 = vmatpush.msra.mxu0 0.0
        %534 = vmatpush.msra.mxu0 0.0
        %535 = vmatpush.msra.mxu0 0.0
        %536 = vmatpush.msra.mxu0 0.0
        %537 = vmatpush.msra.mxu0 0.0
        %538 = vmatpush.msra.mxu0 0.0
        %539 = vmatpush.msra.mxu0 0.0
        %540 = vmatpush.msra.mxu0 0.0
        %541 = vmatpush.msra.mxu0 0.0
        %542 = vmatpush.msra.mxu0 0.0
        %543 = vmatpush.msra.mxu0 0.0
        %544 = vmatpush.msra.mxu0 %v254
        %545 = vmatpush.msra.mxu0 %v253
        %546 = vmatpush.msra.mxu0 %v252
        %547 = vmatpush.msra.mxu0 %v251
        %548 = vmatmul.f32.gmra.mxu0 %v530
        %v549 = vpop.f32.mrf.mxu0
        %v550 = vadd.f32 0.0, %v549
        %551 = vdwg.mxu0
        %v552 = vadd.f32 %v502, %v550
        %v553 = vadd.f32 %v552, %v305
        %v555 = vsel %vm249, %v553, 0
        %557 = vmatpush.msra.mxu0 0.0
        %558 = vmatpush.msra.mxu0 0.0
        %559 = vmatpush.msra.mxu0 0.0
        %560 = vmatpush.msra.mxu0 0.0
        %561 = vmatpush.msra.mxu0 0.0
        %562 = vmatpush.msra.mxu0 0.0
        %563 = vmatpush.msra.mxu0 0.0
        %564 = vmatpush.msra.mxu0 0.0
        %565 = vmatpush.msra.mxu0 0.0
        %566 = vmatpush.msra.mxu0 0.0
        %567 = vmatpush.msra.mxu0 0.0
        %568 = vmatpush.msra.mxu0 0.0
        %569 = vmatpush.msra.mxu0 0.0
        %570 = vmatpush.msra.mxu0 0.0
        %571 = vmatpush.msra.mxu0 %v213
        %572 = vmatpush.msra.mxu0 %v212
        %573 = vmatmul.f32.gmra.mxu0 %v555
        %v574 = vpop.f32.mrf.mxu0
        %v575 = vadd.f32 %v247, %v574
        %576 = vdwg.mxu0
        %v577 = vtanh.pop %v575
        %v579 = vsel %vm280, %v577, 0
        %581 = vmatpush.msra.mxu0 0.0
        %582 = vmatpush.msra.mxu0 0.0
        %583 = vmatpush.msra.mxu0 0.0
        %584 = vmatpush.msra.mxu0 0.0
        %585 = vmatpush.msra.mxu0 0.0
        %586 = vmatpush.msra.mxu0 0.0
        %587 = vmatpush.msra.mxu0 0.0
        %588 = vmatpush.msra.mxu0 0.0
        %589 = vmatpush.msra.mxu0 0.0
        %590 = vmatpush.msra.mxu0 0.0
        %591 = vmatpush.msra.mxu0 0.0
        %592 = vmatpush.msra.mxu0 0.0
        %593 = vmatpush.msra.mxu0 %v254
        %594 = vmatpush.msra.mxu0 %v253
        %595 = vmatpush.msra.mxu0 %v252
        %596 = vmatpush.msra.mxu0 %v251
        %597 = vmatmul.f32.gmra.mxu0 %v579
        %v598 = vpop.f32.mrf.mxu0
        %v599 = vadd.f32 0.0, %v598
        %600 = vdwg.mxu0
        %v601 = vadd.f32 %v553, %v599
        %v602 = vadd.f32 %v601, %v305
        %v604 = vsel %vm249, %v602, 0
        %606 = vmatpush.msra.mxu0 0.0
        %607 = vmatpush.msra.mxu0 0.0
        %608 = vmatpush.msra.mxu0 0.0
        %609 = vmatpush.msra.mxu0 0.0
        %610 = vmatpush.msra.mxu0 0.0
        %611 = vmatpush.msra.mxu0 0.0
        %612 = vmatpush.msra.mxu0 0.0
        %613 = vmatpush.msra.mxu0 0.0
        %614 = vmatpush.msra.mxu0 0.0
        %615 = vmatpush.msra.mxu0 0.0
        %616 = vmatpush.msra.mxu0 0.0
        %617 = vmatpush.msra.mxu0 0.0
        %618 = vmatpush.msra.mxu0 0.0
        %619 = vmatpush.msra.mxu0 0.0
        %620 = vmatpush.msra.mxu0 %v213
        %621 = vmatpush.msra.mxu0 %v212
        %622 = vmatmul.f32.gmra.mxu0 %v604
        %v623 = vpop.f32.mrf.mxu0
        %v624 = vadd.f32 %v247, %v623
        %625 = vdwg.mxu0
        %v626 = vtanh.pop %v624
        %v628 = vsel %vm280, %v626, 0
        %630 = vmatpush.msra.mxu0 0.0
        %631 = vmatpush.msra.mxu0 0.0
        %632 = vmatpush.msra.mxu0 0.0
        %633 = vmatpush.msra.mxu0 0.0
        %634 = vmatpush.msra.mxu0 0.0
        %635 = vmatpush.msra.mxu0 0.0
        %636 = vmatpush.msra.mxu0 0.0
        %637 = vmatpush.msra.mxu0 0.0
        %638 = vmatpush.msra.mxu0 0.0
        %639 = vmatpush.msra.mxu0 0.0
        %640 = vmatpush.msra.mxu0 0.0
        %641 = vmatpush.msra.mxu0 0.0
        %642 = vmatpush.msra.mxu0 %v254
        %643 = vmatpush.msra.mxu0 %v253
        %644 = vmatpush.msra.mxu0 %v252
        %645 = vmatpush.msra.mxu0 %v251
        %646 = vmatmul.f32.gmra.mxu0 %v628
        %v647 = vpop.f32.mrf.mxu0
        %v648 = vadd.f32 0.0, %v647
        %649 = vdwg.mxu0
        %v650 = vadd.f32 %v602, %v648
        %v651 = vadd.f32 %v650, %v305
        %v653 = vsel %vm249, %v651, 0
        %655 = vmatpush.msra.mxu0 0.0
        %656 = vmatpush.msra.mxu0 0.0
        %657 = vmatpush.msra.mxu0 0.0
        %658 = vmatpush.msra.mxu0 0.0
        %659 = vmatpush.msra.mxu0 0.0
        %660 = vmatpush.msra.mxu0 0.0
        %661 = vmatpush.msra.mxu0 0.0
        %662 = vmatpush.msra.mxu0 0.0
        %663 = vmatpush.msra.mxu0 0.0
        %664 = vmatpush.msra.mxu0 0.0
        %665 = vmatpush.msra.mxu0 0.0
        %666 = vmatpush.msra.mxu0 0.0
        %667 = vmatpush.msra.mxu0 0.0
        %668 = vmatpush.msra.mxu0 0.0
        %669 = vmatpush.msra.mxu0 %v213
        %670 = vmatpush.msra.mxu0 %v212
        %671 = vmatmul.f32.gmra.mxu0 %v653
        %v672 = vpop.f32.mrf.mxu0
        %v673 = vadd.f32 %v247, %v672
        %674 = vdwg.mxu0
        %v675 = vtanh.pop %v673
        %v677 = vsel %vm280, %v675, 0
        %679 = vmatpush.msra.mxu0 0.0
        %680 = vmatpush.msra.mxu0 0.0
        %681 = vmatpush.msra.mxu0 0.0
        %682 = vmatpush.msra.mxu0 0.0
        %683 = vmatpush.msra.mxu0 0.0
        %684 = vmatpush.msra.mxu0 0.0
        %685 = vmatpush.msra.mxu0 0.0
        %686 = vmatpush.msra.mxu0 0.0
        %687 = vmatpush.msra.mxu0 0.0
        %688 = vmatpush.msra.mxu0 0.0
        %689 = vmatpush.msra.mxu0 0.0
        %690 = vmatpush.msra.mxu0 0.0
        %691 = vmatpush.msra.mxu0 %v254
        %692 = vmatpush.msra.mxu0 %v253
        %693 = vmatpush.msra.mxu0 %v252
        %694 = vmatpush.msra.mxu0 %v251
        %695 = vmatmul.f32.gmra.mxu0 %v677
        %v696 = vpop.f32.mrf.mxu0
        %v697 = vadd.f32 0.0, %v696
        %698 = vdwg.mxu0
        %v699 = vadd.f32 %v651, %v697
        %v700 = vadd.f32 %v699, %v305
        %v702 = vsel %vm249, %v700, 0
        %704 = vmatpush.msra.mxu0 0.0
        %705 = vmatpush.msra.mxu0 0.0
        %706 = vmatpush.msra.mxu0 0.0
        %707 = vmatpush.msra.mxu0 0.0
        %708 = vmatpush.msra.mxu0 0.0
        %709 = vmatpush.msra.mxu0 0.0
        %710 = vmatpush.msra.mxu0 0.0
        %711 = vmatpush.msra.mxu0 0.0
        %712 = vmatpush.msra.mxu0 0.0
        %713 = vmatpush.msra.mxu0 0.0
        %714 = vmatpush.msra.mxu0 0.0
        %715 = vmatpush.msra.mxu0 0.0
        %716 = vmatpush.msra.mxu0 0.0
        %717 = vmatpush.msra.mxu0 0.0
        %718 = vmatpush.msra.mxu0 %v213
        %719 = vmatpush.msra.mxu0 %v212
        %720 = vmatmul.f32.gmra.mxu0 %v702
        %v721 = vpop.f32.mrf.mxu0
        %v722 = vadd.f32 %v247, %v721
        %723 = vdwg.mxu0
        %v724 = vtanh.pop %v722
        %v726 = vsel %vm280, %v724, 0
        %728 = vmatpush.msra.mxu0 0.0
        %729 = vmatpush.msra.mxu0 0.0
        %730 = vmatpush.msra.mxu0 0.0
        %731 = vmatpush.msra.mxu0 0.0
        %732 = vmatpush.msra.mxu0 0.0
        %733 = vmatpush.msra.mxu0 0.0
        %734 = vmatpush.msra.mxu0 0.0
        %735 = vmatpush.msra.mxu0 0.0
        %736 = vmatpush.msra.mxu0 0.0
        %737 = vmatpush.msra.mxu0 0.0
        %738 = vmatpush.msra.mxu0 0.0
        %739 = vmatpush.msra.mxu0 0.0
        %740 = vmatpush.msra.mxu0 %v254
        %741 = vmatpush.msra.mxu0 %v253
        %742 = vmatpush.msra.mxu0 %v252
        %743 = vmatpush.msra.mxu0 %v251
        %744 = vmatmul.f32.gmra.mxu0 %v726
        %v745 = vpop.f32.mrf.mxu0
        %v746 = vadd.f32 0.0, %v745
        %747 = vdwg.mxu0
        %v748 = vadd.f32 %v700, %v746
        %v749 = vadd.f32 %v748, %v305
        %s750 = scalar_lea.vmem %s201, 16 [#allocation2]
        %751 = vst.msk [vmem:[%s750] sm:$0xff] %vm249, %v749
        %s752 = sand.u32 %s120, 1
        %s753 = scalar_lea.sflag [#allocation3], %s752
        %s754 = sand.u32 %s120, 1
        %s755 = smul.addr %s754, 24
        %s756 = scalar_lea.vmem [#allocation2], %s755
        // Predicated region
        $region37: #{tpu_custom_call.1} parent=35 // pred_check
          %p757 = pneg %p130
        $region38: #{tpu_custom_call.1} parent=35 // pred_check_branch
          %759 = sbr.rel (%p757) target = $region40
        $region39: #{tpu_custom_call.1} parent=35 // pred_region
          %761 = vsyncadd %s753, 0
          %s762 = smul.addr %s18, 8
          %s763 = scalar_lea.hbm %s4, %s762
          %s764 = sshll.u32 %s756, 4
          %s765 = int_to_ptr.vmem [resolvable:$true] %s764
          %s766 = sshll.u32 %s763, 4
          %s767 = int_to_ptr.hbm [resolvable:$true] %s766
          %772 = dma.vmem_to_hbm [thread:$0]  %s765, 384, %s767, %s753, 128, 256, 8
        $region40: #{tpu_custom_call.1} parent=35 // pred_fallthru
          _
      $region36: #{tpu_custom_call.1} parent=5 // pred_fallthru
        _
      %p773 = scmp.le.s32.totalorder 2, %s13
      // Predicated region
      $region41: #{tpu_custom_call.1} parent=5 // pred_check
        %p774 = pneg %p773
      $region42: #{tpu_custom_call.1} parent=5 // pred_check_branch
        %776 = sbr.rel (%p774) target = $region44
      $region43: #{tpu_custom_call.1} parent=5 // pred_region
        %s777 = ssub.s32 %s13, 2
        // Predicated region
        $region45: #{tpu_custom_call.1} parent=43 // pred_check
          %p778 = pneg %p136
        $region46: #{tpu_custom_call.1} parent=43 // pred_check_branch
          %780 = sbr.rel (%p778) target = $region48
        $region47: #{tpu_custom_call.1} parent=43 // pred_region
          %s781 = sand.u32 %s121, 1
          %s782 = scalar_lea.sflag [#allocation3], %s781
          %s783 = sand.u32 %s121, 1
          %s784 = smul.addr %s783, 24
          %s785 = scalar_lea.vmem [#allocation2], %s784
          %787 = dma.done %s782, 384
        $region48: #{tpu_custom_call.1} parent=43 // pred_fallthru
          _
      $region44: #{tpu_custom_call.1} parent=5 // pred_fallthru
        _
    $region6: #{tpu_custom_call.1} parent=1 // loop_footer
      %s17 = sadd.s32 1, %s13
    $region7: #{tpu_custom_call.1} parent=1 // loop_footer_branch
      %12 = sbr.rel target = $region3
    $region8: #{tpu_custom_call.1} parent=1 // loop_exit
      _
    %788 = vsyncpa [#allocation3], 1
    %s789 = scalar_lea.sflag [#allocation3], 1
    %790 = vsyncpa %s789, 1

</llo_original>
